<compile_context>
chip_gen: v5e
topology: v5e:2x2
jax: 0.10.0
libtpu: 0.0.40
codegen_flags: <defaults>
</compile_context>

<pallas_src>
import functools

import jax
import jax.numpy as jnp
from jax.experimental import pallas as pl
from jax.experimental.pallas import tpu as pltpu


def _round_up(a, m):
    return ((a + m - 1) // m) * m


# ----------------------------- Pallas kernel --------------------------------
def _generator_kernel(x_ref,
                      w1_ref, b1_ref,
                      w2_ref, b2_ref,
                      wh_ref, bh_ref,
                      out_ref):
    """Fused MultiDenseLayer (2 x Linear+Tanh) + fused (edges||nodes) head.

    MXU operands are bf16 (cast outside the kernel for weights / x),
    accumulation and the tanh/bias elementwise math stay f32 (safe on v5e),
    final store is bf16 (halves HBM writeback).
    """
    h = jnp.dot(x_ref[...], w1_ref[...],
                preferred_element_type=jnp.float32) + b1_ref[...]
    h = jnp.tanh(h)
    h = jnp.dot(h.astype(jnp.bfloat16), w2_ref[...],
                preferred_element_type=jnp.float32) + b2_ref[...]
    h = jnp.tanh(h)
    # Single lane-dense head matmul + unmasked store (edges columns already
    # symmetrized and permuted into (V, V, E) order via the folded weights).
    out = jnp.dot(h.astype(jnp.bfloat16), wh_ref[...],
                  preferred_element_type=jnp.float32) + bh_ref[...]
    out_ref[...] = out.astype(out_ref.dtype)


# ------------------------ One-time parameter folding -------------------------
def prepare_generator_params(params, *, vertexes, edges, nodes):
    """Fold symmetrization + output permute into the edges head, fuse heads
    into one lane-dense matmul, and cast MXU operands to bf16.

    Call this ONCE (outside the per-step jit).  PyTorch semantics folded in:
        y = edges_layer(h).view(-1, E, V, V)
        y = (y + y.permute(0, 1, 3, 2)) / 2
        y = y.permute(0, 2, 3, 1)                    # -> (B, V, V, E)
    All of that is linear in the head output, so it lives in the columns of
    the fused weight matrix.
    """
    (w1, b1, w2, b2, we, be, wn, bn) = params
    hidden = w2.shape[1]
    evv = edges * vertexes * vertexes
    vn = vertexes * nodes
    out_w = evv + vn
    out_w_pad = _round_up(out_w, 128)

    we4 = we.reshape(hidden, edges, vertexes, vertexes)
    be4 = be.reshape(1, edges, vertexes, vertexes)
    we_sym = 0.5 * (we4 + jnp.swapaxes(we4, 2, 3))
    be_sym = 0.5 * (be4 + jnp.swapaxes(be4, 2, 3))
    we_perm = jnp.transpose(we_sym, (0, 2, 3, 1)).reshape(hidden, evv)
    be_perm = jnp.transpose(be_sym, (0, 2, 3, 1)).reshape(1, evv)

    # Fuse heads; pad output width to a lane-dense multiple of 128 so the
    # kernel's single store is unmasked.
    w_heads = jnp.zeros((hidden, out_w_pad), jnp.float32)
    w_heads = w_heads.at[:, :evv].set(we_perm).at[:, evv:out_w].set(wn)
    b_heads = jnp.zeros((1, out_w_pad), jnp.float32)
    b_heads = b_heads.at[:, :evv].set(be_perm).at[:, evv:out_w].set(bn)

    prepped = (
        w1.astype(jnp.bfloat16), b1,
        w2.astype(jnp.bfloat16), b2,
        w_heads.astype(jnp.bfloat16), b_heads,
    )
    return jax.tree_util.tree_map(jnp.asarray, prepped)


# ----------------------------- Batch tiling policy ---------------------------
def _choose_batch_tiling(batch, block_batch=None):
    """Returns (block_batch, padded_batch, num_steps).

    16-row alignment (dense bf16 sublane packing).  Small batches run as a
    single grid step (fixed overhead dominates).  Large batches split into
    near-equal <=512-row chunks with an EVEN step count so the "parallel"
    batch axis load-balances across v7x's two TensorCores (and amortizes the
    ~0.35 us/step pipeline overhead everywhere).
    """
    b16 = _round_up(max(batch, 1), 16)
    if block_batch is not None:
        bb = _round_up(block_batch, 16)
        steps = -(-b16 // bb)
        return bb, bb * steps, steps
    if b16 <= 256:
        return b16, b16, 1
    steps = -(-b16 // 512)
    if steps % 2:
        steps += 1
    bb = _round_up(-(-b16 // steps), 16)
    return bb, bb * steps, steps


# ------------------------------ Forward wrapper ------------------------------
def generator_forward(x, prepped, *, vertexes, edges, nodes, block_batch=None):
    """Hot path: bf16 cast of x, optional batch pad, one pallas_call,
    slice + reshape.  `prepped` must come from prepare_generator_params."""
    (w1b, b1, w2b, b2, whb, bh) = prepped
    batch, z_dim = x.shape
    evv = edges * vertexes * vertexes
    vn = vertexes * nodes
    out_w = evv + vn
    out_w_pad = whb.shape[1]

    bb, b_pad, steps = _choose_batch_tiling(batch, block_batch)
    xb = x.astype(jnp.bfloat16)
    xp = xb if b_pad == batch else jnp.pad(xb, ((0, b_pad - batch), (0, 0)))
    grid = (steps,)

    def _rep(shape):
        # Weights/biases are grid-invariant: same (0, 0) block every step.
        return pl.BlockSpec(shape, lambda i: (0, 0))

    out = pl.pallas_call(
        _generator_kernel,
        out_shape=jax.ShapeDtypeStruct((b_pad, out_w_pad), jnp.bfloat16),
        grid=grid,
        in_specs=[
            pl.BlockSpec((bb, z_dim), lambda i: (i, 0)),
            _rep(w1b.shape), _rep(b1.shape),
            _rep(w2b.shape), _rep(b2.shape),
            _rep(whb.shape), _rep(bh.shape),
        ],
        out_specs=pl.BlockSpec((bb, out_w_pad), lambda i: (i, 0)),
        compiler_params=pltpu.CompilerParams(
            dimension_semantics=("parallel",)),
    )(xp, w1b, b1, w2b, b2, whb, bh)

    # Thin glue: slice + reshape only (edges already symmetric, (V, V, E)).
    e = out[:batch, :evv].reshape(batch, vertexes, vertexes, edges)
    n = out[:batch, evv:out_w].reshape(batch, vertexes, nodes)

    # TODO(synk): nn.Dropout is identity at inference; training-mode dropout
    # (with PRNG masking) is not implemented here.
    return e, n


# ------------------------------ Pure-JAX reference ---------------------------
def _reference_forward(x, params, *, vertexes, edges, nodes):
    (w1, b1, w2, b2, we, be, wn, bn) = params
    h = jnp.tanh(x @ w1 + b1)
    h = jnp.tanh(h @ w2 + b2)
    e = (h @ we + be).reshape(-1, edges, vertexes, vertexes)
    e = (e + jnp.transpose(e, (0, 1, 3, 2))) / 2.0
    e = jnp.transpose(e, (0, 2, 3, 1))
    n = (h @ wn + bn).reshape(-1, vertexes, nodes)
    return e, n


# ----------------------------- Parameter init --------------------------------
def _init_linear(key, fan_in, fan_out):
    """Deterministic PyTorch-default-like init: U(-1/sqrt(fan_in), 1/sqrt(fan_in))."""
    kw, kb = jax.random.split(key)
    bound = 1.0 / jnp.sqrt(jnp.asarray(fan_in, jnp.float32))
    w = jax.random.uniform(kw, (fan_in, fan_out), jnp.float32, -bound, bound)
    b = jax.random.uniform(kb, (1, fan_out), jnp.float32, -bound, bound)
    return w, b


def init_generator_params(key, z_dim, conv_dims, vertexes, edges, nodes):
    assert len(conv_dims) == 2, "this script instantiates a 2-layer MultiDenseLayer"
    k1, k2, k3, k4 = jax.random.split(key, 4)
    w1, b1 = _init_linear(k1, z_dim, conv_dims[0])
    w2, b2 = _init_linear(k2, conv_dims[0], conv_dims[1])
    we, be = _init_linear(k3, conv_dims[-1], edges * vertexes * vertexes)
    wn, bn = _init_linear(k4, conv_dims[-1], vertexes * nodes)
    return (w1, b1, w2, b2, we, be, wn, bn)


# ----------------------------------- Main ------------------------------------
if __name__ == "__main__":
    BATCH = 2
    Z_DIM = 8
    CONV_DIMS = [32, 64]
    VERTEXES = 8
    EDGES = 4
    NODES = 5
    DROPOUT_RATE = 0.0  # inference: dropout is identity

    key = jax.random.PRNGKey(0)
    k_params, k_x = jax.random.split(key)

    params = init_generator_params(k_params, Z_DIM, CONV_DIMS, VERTEXES, EDGES, NODES)
    x = jax.random.normal(k_x, (BATCH, Z_DIM), jnp.float32)

    # One-time weight folding / fusing / bf16 casts (OUTSIDE the hot path).
    prepped = prepare_generator_params(
        params, vertexes=VERTEXES, edges=EDGES, nodes=NODES)
    prepped = jax.block_until_ready(prepped)

    # Note: at BATCH=2 the Pallas call is pure fixed overhead; this tiling /
    # dtype work pays off at realistic (hundreds+) batch sizes.
    fwd = jax.jit(
        functools.partial(
            generator_forward, vertexes=VERTEXES, edges=EDGES, nodes=NODES
        )
    )
    edges_logits, nodes_logits = fwd(x, prepped)
    jax.block_until_ready((edges_logits, nodes_logits))

    # Shape checks.
    assert edges_logits.shape == (BATCH, VERTEXES, VERTEXES, EDGES)
    assert nodes_logits.shape == (BATCH, VERTEXES, NODES)

    # Symmetry check: edges_logits[b, i, j, e] == edges_logits[b, j, i, e].
    # (Symmetric weight columns are bitwise identical, so this holds exactly
    # even with bf16 operands/output.)
    assert jnp.allclose(edges_logits.astype(jnp.float32),
                        jnp.transpose(edges_logits, (0, 2, 1, 3)).astype(jnp.float32),
                        atol=1e-6)

    # Numerical check vs. pure-JAX f32 reference (bf16 MXU operands + bf16
    # output -> loose tolerance).
    e_ref, n_ref = _reference_forward(
        x, params, vertexes=VERTEXES, edges=EDGES, nodes=NODES)
    assert jnp.allclose(edges_logits.astype(jnp.float32), e_ref, atol=5e-2, rtol=5e-2)
    assert jnp.allclose(nodes_logits.astype(jnp.float32), n_ref, atol=5e-2, rtol=5e-2)

    print("KERNEL_OK")
</pallas_src>

<mosaic_0001>
module attributes {stable_mosaic.version = 11 : i64} {
  func.func @_generator_kernel(%arg0: i32, %arg1: memref<16x8xbf16, #tpu.memory_space<vmem>>, %arg2: memref<8x32xbf16, #tpu.memory_space<vmem>>, %arg3: memref<1x32xf32, #tpu.memory_space<vmem>>, %arg4: memref<32x64xbf16, #tpu.memory_space<vmem>>, %arg5: memref<1x64xf32, #tpu.memory_space<vmem>>, %arg6: memref<64x384xbf16, #tpu.memory_space<vmem>>, %arg7: memref<1x384xf32, #tpu.memory_space<vmem>>, %arg8: memref<16x384xbf16, #tpu.memory_space<vmem>>) attributes {dimension_semantics = [#tpu.dimension_semantics<parallel>], iteration_bounds = array<i64: 1>, scalar_prefetch = 0 : i64, scratch_operands = 0 : i64, tpu.core_type = #tpu.core_type<tc>, window_params = [{transform_indices = @transform_0, window_bounds = array<i64: 16, 8>}, {pipeline_mode = #tpu.pipeline_mode<synchronous>, transform_indices = @transform_1, window_bounds = array<i64: 8, 32>}, {pipeline_mode = #tpu.pipeline_mode<synchronous>, transform_indices = @transform_2, window_bounds = array<i64: 1, 32>}, {pipeline_mode = #tpu.pipeline_mode<synchronous>, transform_indices = @transform_3, window_bounds = array<i64: 32, 64>}, {pipeline_mode = #tpu.pipeline_mode<synchronous>, transform_indices = @transform_4, window_bounds = array<i64: 1, 64>}, {pipeline_mode = #tpu.pipeline_mode<synchronous>, transform_indices = @transform_5, window_bounds = array<i64: 64, 384>}, {pipeline_mode = #tpu.pipeline_mode<synchronous>, transform_indices = @transform_6, window_bounds = array<i64: 1, 384>}, {transform_indices = @transform_7, window_bounds = array<i64: 16, 384>}]} {
    %c0 = arith.constant 0 : index
    %c0_0 = arith.constant 0 : index
    %0 = vector.load %arg1[%c0, %c0_0] : memref<16x8xbf16, #tpu.memory_space<vmem>>, vector<16x8xbf16>
    %c0_1 = arith.constant 0 : index
    %c0_2 = arith.constant 0 : index
    %1 = vector.load %arg2[%c0_1, %c0_2] : memref<8x32xbf16, #tpu.memory_space<vmem>>, vector<8x32xbf16>
    %cst = arith.constant dense<0.000000e+00> : vector<16x32xf32>
    %2 = tpu.matmul %0, %1, %cst {dimension_numbers = #tpu.dot_dimension_numbers<[1], [0], [0], [1], [0, 0, 1, 1], [], []>} : vector<16x8xbf16>, vector<8x32xbf16>, vector<16x32xf32> -> vector<16x32xf32>
    %c0_3 = arith.constant 0 : index
    %c0_4 = arith.constant 0 : index
    %3 = vector.load %arg3[%c0_3, %c0_4] : memref<1x32xf32, #tpu.memory_space<vmem>>, vector<1x32xf32>
    %4 = vector.broadcast %3 : vector<1x32xf32> to vector<16x32xf32>
    %5 = arith.addf %2, %4 : vector<16x32xf32>
    %6 = math.tanh %5 : vector<16x32xf32>
    %7 = arith.truncf %6 : vector<16x32xf32> to vector<16x32xbf16>
    %c0_5 = arith.constant 0 : index
    %c0_6 = arith.constant 0 : index
    %8 = vector.load %arg4[%c0_5, %c0_6] : memref<32x64xbf16, #tpu.memory_space<vmem>>, vector<32x64xbf16>
    %cst_7 = arith.constant dense<0.000000e+00> : vector<16x64xf32>
    %9 = tpu.matmul %7, %8, %cst_7 {dimension_numbers = #tpu.dot_dimension_numbers<[1], [0], [0], [1], [0, 0, 1, 1], [], []>} : vector<16x32xbf16>, vector<32x64xbf16>, vector<16x64xf32> -> vector<16x64xf32>
    %c0_8 = arith.constant 0 : index
    %c0_9 = arith.constant 0 : index
    %10 = vector.load %arg5[%c0_8, %c0_9] : memref<1x64xf32, #tpu.memory_space<vmem>>, vector<1x64xf32>
    %11 = vector.broadcast %10 : vector<1x64xf32> to vector<16x64xf32>
    %12 = arith.addf %9, %11 : vector<16x64xf32>
    %13 = math.tanh %12 : vector<16x64xf32>
    %14 = arith.truncf %13 : vector<16x64xf32> to vector<16x64xbf16>
    %c0_10 = arith.constant 0 : index
    %c0_11 = arith.constant 0 : index
    %15 = vector.load %arg6[%c0_10, %c0_11] : memref<64x384xbf16, #tpu.memory_space<vmem>>, vector<64x384xbf16>
    %cst_12 = arith.constant dense<0.000000e+00> : vector<16x384xf32>
    %16 = tpu.matmul %14, %15, %cst_12 {dimension_numbers = #tpu.dot_dimension_numbers<[1], [0], [0], [1], [0, 0, 1, 1], [], []>} : vector<16x64xbf16>, vector<64x384xbf16>, vector<16x384xf32> -> vector<16x384xf32>
    %c0_13 = arith.constant 0 : index
    %c0_14 = arith.constant 0 : index
    %17 = vector.load %arg7[%c0_13, %c0_14] : memref<1x384xf32, #tpu.memory_space<vmem>>, vector<1x384xf32>
    %18 = vector.broadcast %17 : vector<1x384xf32> to vector<16x384xf32>
    %19 = arith.addf %16, %18 : vector<16x384xf32>
    %20 = arith.truncf %19 : vector<16x384xf32> to vector<16x384xbf16>
    %c0_15 = arith.constant 0 : index
    %c0_16 = arith.constant 0 : index
    %21 = vector.load %arg8[%c0_15, %c0_16] : memref<16x384xbf16, #tpu.memory_space<vmem>>, vector<16x384xbf16>
    tpu.vector_store %arg8[%c0_15, %c0_16], %20 {strides = array<i32>} : memref<16x384xbf16, #tpu.memory_space<vmem>>, vector<16x384xbf16>,
    return
  }
  func.func @transform_0(%arg0: i32) -> (i32, i32) {
    %c0_i32 = arith.constant 0 : i32
    %c0_i32_0 = arith.constant 0 : i32
    return %arg0, %c0_i32 : i32, i32
  }
  func.func @transform_1(%arg0: i32) -> (i32, i32) {
    %c0_i32 = arith.constant 0 : i32
    %c0_i32_0 = arith.constant 0 : i32
    %c0_i32_1 = arith.constant 0 : i32
    return %c0_i32, %c0_i32_0 : i32, i32
  }
  func.func @transform_2(%arg0: i32) -> (i32, i32) {
    %c0_i32 = arith.constant 0 : i32
    %c0_i32_0 = arith.constant 0 : i32
    %c0_i32_1 = arith.constant 0 : i32
    return %c0_i32, %c0_i32_0 : i32, i32
  }
  func.func @transform_3(%arg0: i32) -> (i32, i32) {
    %c0_i32 = arith.constant 0 : i32
    %c0_i32_0 = arith.constant 0 : i32
    %c0_i32_1 = arith.constant 0 : i32
    return %c0_i32, %c0_i32_0 : i32, i32
  }
  func.func @transform_4(%arg0: i32) -> (i32, i32) {
    %c0_i32 = arith.constant 0 : i32
    %c0_i32_0 = arith.constant 0 : i32
    %c0_i32_1 = arith.constant 0 : i32
    return %c0_i32, %c0_i32_0 : i32, i32
  }
  func.func @transform_5(%arg0: i32) -> (i32, i32) {
    %c0_i32 = arith.constant 0 : i32
    %c0_i32_0 = arith.constant 0 : i32
    %c0_i32_1 = arith.constant 0 : i32
    return %c0_i32, %c0_i32_0 : i32, i32
  }
  func.func @transform_6(%arg0: i32) -> (i32, i32) {
    %c0_i32 = arith.constant 0 : i32
    %c0_i32_0 = arith.constant 0 : i32
    %c0_i32_1 = arith.constant 0 : i32
    return %c0_i32, %c0_i32_0 : i32, i32
  }
  func.func @transform_7(%arg0: i32) -> (i32, i32) {
    %c0_i32 = arith.constant 0 : i32
    %c0_i32_0 = arith.constant 0 : i32
    return %arg0, %c0_i32 : i32, i32
  }
}

</mosaic_0001>

<llo_original>
// kernel: generator_forward.1
$region0: #{generator_forward.1}
  #allocation0 [shape = 'u32[]', space=smem, size = 0x4, offset = 0x4, fixed_abs, tag = 'smem constant byte address 0x4 - core index']
  #allocation1 [shape = 'u32[72,128]{1,0:T(1,128)}', space=vmem, size = 0x9000, scoped, tag = 'internal scratch']
  %s0 = inlined_call_operand.vmem [shape: bf16[16,8], index: 0, kind: input, shape index: {}]
  %s1 = inlined_call_operand.vmem [shape: bf16[8,32], index: 1, kind: input, shape index: {}]
  %s2 = inlined_call_operand.vmem [shape: f32[1,32], index: 2, kind: input, shape index: {}]
  %s3 = inlined_call_operand.hbm [shape: bf16[32,64], index: 3, kind: input, shape index: {}]
  %s4 = inlined_call_operand.vmem [shape: f32[1,64], index: 4, kind: input, shape index: {}]
  %s5 = inlined_call_operand.hbm [shape: bf16[64,384], index: 5, kind: input, shape index: {}]
  %s6 = inlined_call_operand.vmem [shape: f32[1,384], index: 6, kind: input, shape index: {}]
  %s7 = inlined_call_operand.vmem [shape: bf16[16,384], index: 7, kind: output, shape index: {}]
  %s8 = sld [smem:[#allocation0]]
  $region46: #{generator_forward.1} parent=0
    _
  %s10 = ssub.s32 1, %s8
  %s11 = scalar_select 0, %s10, %s8
  $region1: #{generator_forward.1} parent=0
    #allocation2 [shape = 'u8[8192]{0}', space=vmem, size = 0x2000, scoped, tag = 'input window, operand 3, single buffered']
    #allocation3 [shape = 's32[1]{0}', space=sflag, size = 0x4, scoped, tag = 'scoped memory for generator_forward.1']
    #allocation4 [shape = 'u8[49152]{0}', space=vmem, size = 0xc000, scoped, tag = 'input window, operand 5, single buffered']
    #allocation5 [shape = 's32[1]{0}', space=sflag, size = 0x4, scoped, tag = 'scoped memory for generator_forward.1']
    %12 = vsyncpa [#allocation3], 0
    %13 = vsyncpa [#allocation5], 0
    // Predicated region
    $region2: #{generator_forward.1} parent=1 // pred_check
      _
    $region3: #{generator_forward.1} parent=1 // pred_check_branch
      %15 = sbr.rel (0) target = $region5
    $region4: #{generator_forward.1} parent=1 // pred_region
      _
    $region5: #{generator_forward.1} parent=1 // pred_fallthru
      _
    // Predicated region
    $region6: #{generator_forward.1} parent=1 // pred_check
      _
    $region7: #{generator_forward.1} parent=1 // pred_check_branch
      %17 = sbr.rel (0) target = $region9
    $region8: #{generator_forward.1} parent=1 // pred_region
      _
    $region9: #{generator_forward.1} parent=1 // pred_fallthru
      _
    // Predicated region
    $region10: #{generator_forward.1} parent=1 // pred_check
      _
    $region11: #{generator_forward.1} parent=1 // pred_check_branch
      %19 = sbr.rel (0) target = $region13
    $region12: #{generator_forward.1} parent=1 // pred_region
      _
    $region13: #{generator_forward.1} parent=1 // pred_fallthru
      _
    // Predicated region
    $region14: #{generator_forward.1} parent=1 // pred_check
      _
    $region15: #{generator_forward.1} parent=1 // pred_check_branch
      %21 = sbr.rel (0) target = $region17
    $region16: #{generator_forward.1} parent=1 // pred_region
      %23 = vsyncadd [#allocation3], 0
      %s24 = sshll.u32 %s3, 4
      %s25 = int_to_ptr.hbm [resolvable:$true] %s24
      %s26 = sshll.u32 [#allocation2], 4
      %s27 = int_to_ptr.vmem [resolvable:$true] %s26
      %32 = dma.hbm_to_vmem [thread:$0]  %s25, 256, %s27, [#allocation3], 64, 64, 4
    $region17: #{generator_forward.1} parent=1 // pred_fallthru
      _
    // Predicated region
    $region18: #{generator_forward.1} parent=1 // pred_check
      _
    $region19: #{generator_forward.1} parent=1 // pred_check_branch
      %34 = sbr.rel (0) target = $region21
    $region20: #{generator_forward.1} parent=1 // pred_region
      _
    $region21: #{generator_forward.1} parent=1 // pred_fallthru
      _
    // Predicated region
    $region22: #{generator_forward.1} parent=1 // pred_check
      _
    $region23: #{generator_forward.1} parent=1 // pred_check_branch
      %36 = sbr.rel (0) target = $region25
    $region24: #{generator_forward.1} parent=1 // pred_region
      %38 = vsyncadd [#allocation5], 0
      %s39 = sshll.u32 %s5, 4
      %s40 = int_to_ptr.hbm [resolvable:$true] %s39
      %s41 = sshll.u32 [#allocation4], 4
      %s42 = int_to_ptr.vmem [resolvable:$true] %s41
      %47 = dma.hbm_to_vmem [thread:$0]  %s40, 1536, %s42, [#allocation5], 192, 192, 12
    $region25: #{generator_forward.1} parent=1 // pred_fallthru
      _
    // Predicated region
    $region26: #{generator_forward.1} parent=1 // pred_check
      _
    $region27: #{generator_forward.1} parent=1 // pred_check_branch
      %49 = sbr.rel (0) target = $region29
    $region28: #{generator_forward.1} parent=1 // pred_region
      _
    $region29: #{generator_forward.1} parent=1 // pred_fallthru
      _
    // Predicated region
    $region30: #{generator_forward.1} parent=1 // pred_check
      _
    $region31: #{generator_forward.1} parent=1 // pred_check_branch
      %51 = sbr.rel (0) target = $region33
    $region32: #{generator_forward.1} parent=1 // pred_region
      %53 = dma.done [#allocation3], 256
    $region33: #{generator_forward.1} parent=1 // pred_fallthru
      _
    // Predicated region
    $region34: #{generator_forward.1} parent=1 // pred_check
      _
    $region35: #{generator_forward.1} parent=1 // pred_check_branch
      %55 = sbr.rel (0) target = $region37
    $region36: #{generator_forward.1} parent=1 // pred_region
      %57 = dma.done [#allocation5], 1536
    $region37: #{generator_forward.1} parent=1 // pred_fallthru
      _
    %v59 = vld [vmem:[%s0] sm:$0xf]
    %v60 = vld [vmem:[%s0 + $0x4] sm:$0xf]
    %v61 = vld [vmem:[%s1] sm:$0xf]
    %v62 = vld [vmem:[%s2] sm:$0x1]
    %v64 = vperm.slane %v62, 0
    %v68 = vunpack.c.l.b16 %v59
    %v69 = vunpack.c.l.b16 %v60
    %v70 = vpack.c.b16 %v69, %v68
    %vm71 = vcmask 64512
    %v73 = vsel %vm71, %v70, 0
    %vm75 = vcmask 1043456
    %v77 = vsel %vm75, %v61, 0
    %79 = vmatpush.bf16.msra.mxu0 0
    %80 = vmatpush.bf16.msra.mxu0 0
    %81 = vmatpush.bf16.msra.mxu0 0
    %82 = vmatpush.bf16.msra.mxu0 0
    %83 = vmatpush.bf16.msra.mxu0 0
    %84 = vmatpush.bf16.msra.mxu0 0
    %85 = vmatpush.bf16.msra.mxu0 0
    %86 = vmatpush.bf16.msra.mxu0 %v77
    %87 = vmatmul.bf16.gmra.mxu0 %v73
    %v88 = vpop.f32.mrf.mxu0
    %v89 = vadd.f32 %v64, %v88
    %v90 = vpop.f32.mrf.mxu0
    %v91 = vadd.f32 %v64, %v90
    %92 = vdwg.mxu0
    %v93 = vtanh.pop %v89
    %v94 = vtanh.pop %v91
    %v95 = vpack.c.bf16 %v94, %v93
    %v96 = vld [vmem:[#allocation2] sm:$0xf]
    %v97 = vld [vmem:[#allocation2 + $0x4] sm:$0xf]
    %v98 = vld [vmem:[#allocation2 + $0x8] sm:$0xf]
    %v99 = vld [vmem:[#allocation2 + $0xc] sm:$0xf]
    %v100 = vld [vmem:[%s4] sm:$0x1]
    %v102 = vperm.slane %v100, 0
    %v108 = vunpack.c.l.b16 %v96
    %v109 = vunpack.c.l.b16 %v97
    %v110 = vunpack.c.l.b16 %v98
    %v111 = vunpack.c.l.b16 %v99
    %v112 = vpack.c.b16 %v109, %v108
    %v113 = vpack.c.b16 %v111, %v110
    %vm116 = vcmask 261120
    %v118 = vsel %vm116, %v95, 0
    %120 = vmatpush.bf16.msra.mxu0 0
    %121 = vmatpush.bf16.msra.mxu0 0
    %122 = vmatpush.bf16.msra.mxu0 0
    %123 = vmatpush.bf16.msra.mxu0 0
    %124 = vmatpush.bf16.msra.mxu0 0
    %125 = vmatpush.bf16.msra.mxu0 0
    %126 = vmatpush.bf16.msra.mxu0 %v113
    %127 = vmatpush.bf16.msra.mxu0 %v112
    %128 = vmatmul.bf16.gmra.mxu0 %v118
    %v129 = vpop.f32.mrf.mxu0
    %v130 = vadd.f32 %v102, %v129
    %v131 = vpop.f32.mrf.mxu0
    %v132 = vadd.f32 %v102, %v131
    %133 = vdwg.mxu0
    %v134 = vtanh.pop %v130
    %v135 = vtanh.pop %v132
    %v136 = vpack.c.bf16 %v135, %v134
    %v137 = vld [vmem:[#allocation4] sm:$0xff]
    %v138 = vld [vmem:[#allocation4 + $0x8] sm:$0xf]
    %v139 = vld [vmem:[#allocation4 + $0xc] sm:$0xff]
    %v140 = vld [vmem:[#allocation4 + $0x14] sm:$0xf]
    %v141 = vld [vmem:[#allocation4 + $0x18] sm:$0xff]
    %v142 = vld [vmem:[#allocation4 + $0x20] sm:$0xf]
    %v143 = vld [vmem:[#allocation4 + $0x24] sm:$0xff]
    %v144 = vld [vmem:[#allocation4 + $0x2c] sm:$0xf]
    %v145 = vld [vmem:[#allocation4 + $0x30] sm:$0xff]
    %v146 = vld [vmem:[#allocation4 + $0x38] sm:$0xf]
    %v147 = vld [vmem:[#allocation4 + $0x3c] sm:$0xff]
    %v148 = vld [vmem:[#allocation4 + $0x44] sm:$0xf]
    %v149 = vld [vmem:[#allocation4 + $0x48] sm:$0xff]
    %v150 = vld [vmem:[#allocation4 + $0x50] sm:$0xf]
    %v151 = vld [vmem:[#allocation4 + $0x54] sm:$0xff]
    %v152 = vld [vmem:[#allocation4 + $0x5c] sm:$0xf]
    %v153 = vld [vmem:[%s6] sm:$0x7]
    %v155 = vperm.slane %v153, 0
    %v156 = vperm.slane %v153, 1
    %v157 = vperm.slane %v153, 2
    %v177 = vunpack.c.l.b16 %v137
    %v178 = vunpack.c.h.b16 %v137
    %v179 = vunpack.c.l.b16 %v138
    %v180 = vunpack.c.l.b16 %v139
    %v181 = vunpack.c.h.b16 %v139
    %v182 = vunpack.c.l.b16 %v140
    %v183 = vunpack.c.l.b16 %v141
    %v184 = vunpack.c.h.b16 %v141
    %v185 = vunpack.c.l.b16 %v142
    %v186 = vunpack.c.l.b16 %v143
    %v187 = vunpack.c.h.b16 %v143
    %v188 = vunpack.c.l.b16 %v144
    %v189 = vunpack.c.l.b16 %v145
    %v190 = vunpack.c.h.b16 %v145
    %v191 = vunpack.c.l.b16 %v146
    %v192 = vunpack.c.l.b16 %v147
    %v193 = vunpack.c.h.b16 %v147
    %v194 = vunpack.c.l.b16 %v148
    %v195 = vunpack.c.l.b16 %v149
    %v196 = vunpack.c.h.b16 %v149
    %v197 = vunpack.c.l.b16 %v150
    %v198 = vunpack.c.l.b16 %v151
    %v199 = vunpack.c.h.b16 %v151
    %v200 = vunpack.c.l.b16 %v152
    %v201 = vpack.c.b16 %v180, %v177
    %v202 = vpack.c.b16 %v181, %v178
    %v203 = vpack.c.b16 %v182, %v179
    %v204 = vpack.c.b16 %v186, %v183
    %v205 = vpack.c.b16 %v187, %v184
    %v206 = vpack.c.b16 %v188, %v185
    %v207 = vpack.c.b16 %v192, %v189
    %v208 = vpack.c.b16 %v193, %v190
    %v209 = vpack.c.b16 %v194, %v191
    %v210 = vpack.c.b16 %v198, %v195
    %v211 = vpack.c.b16 %v199, %v196
    %v212 = vpack.c.b16 %v200, %v197
    %vm225 = vcmask 523264
    %v227 = vsel %vm225, %v136, 0
    %229 = vmatpush.bf16.msra.mxu0 0
    %230 = vmatpush.bf16.msra.mxu0 0
    %231 = vmatpush.bf16.msra.mxu0 0
    %232 = vmatpush.bf16.msra.mxu0 0
    %233 = vmatpush.bf16.msra.mxu0 %v210
    %234 = vmatpush.bf16.msra.mxu0 %v207
    %235 = vmatpush.bf16.msra.mxu0 %v204
    %236 = vmatpush.bf16.msra.mxu0 %v201
    %237 = vmatmul.bf16.gmra.mxu0 %v227
    %v238 = vpop.f32.mrf.mxu0
    %v239 = vadd.f32 %v155, %v238
    %v240 = vpop.f32.mrf.mxu0
    %v241 = vadd.f32 %v155, %v240
    %242 = vdwg.mxu0
    %243 = vmatpush.bf16.msra.mxu0 0
    %244 = vmatpush.bf16.msra.mxu0 0
    %245 = vmatpush.bf16.msra.mxu0 0
    %246 = vmatpush.bf16.msra.mxu0 0
    %247 = vmatpush.bf16.msra.mxu0 %v211
    %248 = vmatpush.bf16.msra.mxu0 %v208
    %249 = vmatpush.bf16.msra.mxu0 %v205
    %250 = vmatpush.bf16.msra.mxu0 %v202
    %251 = vmatmul.bf16.gmra.mxu0 %v227
    %v252 = vpop.f32.mrf.mxu0
    %v253 = vadd.f32 %v156, %v252
    %v254 = vpop.f32.mrf.mxu0
    %v255 = vadd.f32 %v156, %v254
    %256 = vdwg.mxu0
    %257 = vmatpush.bf16.msra.mxu0 0
    %258 = vmatpush.bf16.msra.mxu0 0
    %259 = vmatpush.bf16.msra.mxu0 0
    %260 = vmatpush.bf16.msra.mxu0 0
    %261 = vmatpush.bf16.msra.mxu0 %v212
    %262 = vmatpush.bf16.msra.mxu0 %v209
    %263 = vmatpush.bf16.msra.mxu0 %v206
    %264 = vmatpush.bf16.msra.mxu0 %v203
    %265 = vmatmul.bf16.gmra.mxu0 %v227
    %v266 = vpop.f32.mrf.mxu0
    %v267 = vadd.f32 %v157, %v266
    %v268 = vpop.f32.mrf.mxu0
    %v269 = vadd.f32 %v157, %v268
    %270 = vdwg.mxu0
    %v271 = vpack.c.bf16 %v253, %v239
    %v272 = vpack.c.bf16 %v267, %v267
    %v273 = vpack.c.bf16 %v255, %v241
    %v274 = vpack.c.bf16 %v269, %v269
    %275 = vst [vmem:[%s7] sm:$0xff] %v271
    %276 = vst [vmem:[%s7 + $0x8] sm:$0xf] %v272
    %277 = vst [vmem:[%s7 + $0xc] sm:$0xff] %v273
    %278 = vst [vmem:[%s7 + $0x14] sm:$0xf] %v274
    // Predicated region
    $region38: #{generator_forward.1} parent=1 // pred_check
      _
    $region39: #{generator_forward.1} parent=1 // pred_check_branch
      %280 = sbr.rel (0) target = $region41
    $region40: #{generator_forward.1} parent=1 // pred_region
      _
    $region41: #{generator_forward.1} parent=1 // pred_fallthru
      _
    // Predicated region
    $region42: #{generator_forward.1} parent=1 // pred_check
      _
    $region43: #{generator_forward.1} parent=1 // pred_check_branch
      %282 = sbr.rel (0) target = $region45
    $region44: #{generator_forward.1} parent=1 // pred_region
      _
    $region45: #{generator_forward.1} parent=1 // pred_fallthru
      _
    %283 = vsyncpa [#allocation3], 1
    %284 = vsyncpa [#allocation5], 1

</llo_original>
